<compile_context>
chip_gen: v7x
topology: tpu7x:2x2x1
jax: 0.10.0
libtpu: 0.0.40
codegen_flags: <defaults>
</compile_context>

<pallas_src>
import functools

import jax
import jax.numpy as jnp
from jax.experimental import pallas as pl
from jax.experimental.pallas import tpu as pltpu


REPARAM_NOISE = 1e-6
MAX_BATCH_TILE = 4096          # multiple of 8; bounds VMEM for any batch size


def actor_kernel(state_ref, w1_ref, w2_ref, whead_ref, bias_ref,
                 mu_ref, sigma_ref, *, n_actions):
    fc1 = w1_ref.shape[1]
    fc2 = w2_ref.shape[1]
    head_w = whead_ref.shape[1]          # == 2 * n_actions

    # Static views into the packed bias block (one DMA'd array, three rows).
    b1 = bias_ref[0:1, :fc1]             # (1, FC1)
    b2 = bias_ref[1:2, :fc2]             # (1, FC2)
    bh = bias_ref[2:3, :head_w]          # (1, 2A)

    # fc1 + relu  (MXU matmul, f32 accumulation regardless of input dtype)
    x = jnp.dot(state_ref[...], w1_ref[...],
                preferred_element_type=jnp.float32) + b1
    x = jnp.maximum(x, 0.0)
    # fc2 + relu
    x = jnp.dot(x.astype(w2_ref.dtype), w2_ref[...],
                preferred_element_type=jnp.float32) + b2
    x = jnp.maximum(x, 0.0)
    # Fused mu|sigma head: one narrow matmul; result never leaves VMEM/vregs.
    head = jnp.dot(x.astype(whead_ref.dtype), whead_ref[...],
                   preferred_element_type=jnp.float32) + bh
    # Narrow stores: mu untouched, clamp only the sigma columns.
    mu_ref[...] = head[:, :n_actions].astype(mu_ref.dtype)
    sigma_ref[...] = jnp.clip(head[:, n_actions:], REPARAM_NOISE,
                              1.0).astype(sigma_ref.dtype)


def actor_forward(state, packed, n_actions, *, core_parallel=False):
    """Fused ActorNet forward on TPU. Returns (mu, sigma), each f32 (B, A)."""
    B, input_dim = state.shape
    w1, w2 = packed["w1"], packed["w2"]
    whead, bias_pack = packed["whead"], packed["bias_pack"]

    tb = min(B, MAX_BATCH_TILE)          # full B, or a multiple-of-8 tile
    grid = (pl.cdiv(B, tb),)

    # CORE_PARALLEL really splits the batch axis across v7x's 2 TensorCores;
    # PARALLEL is the safe default on single-TC chips (v5e / v6e).
    sem = pltpu.CORE_PARALLEL if core_parallel else pltpu.PARALLEL

    kernel = functools.partial(actor_kernel, n_actions=n_actions)
    mu, sigma = pl.pallas_call(
        kernel,
        out_shape=(jax.ShapeDtypeStruct((B, n_actions), jnp.float32),
                   jax.ShapeDtypeStruct((B, n_actions), jnp.float32)),
        grid=grid,
        in_specs=[
            pl.BlockSpec((tb, input_dim), lambda i: (i, 0)),   # batch-tiled
            pl.BlockSpec(w1.shape, lambda i: (0, 0)),          # VMEM-resident
            pl.BlockSpec(w2.shape, lambda i: (0, 0)),
            pl.BlockSpec(whead.shape, lambda i: (0, 0)),
            pl.BlockSpec(bias_pack.shape, lambda i: (0, 0)),   # packed biases
        ],
        out_specs=(pl.BlockSpec((tb, n_actions), lambda i: (i, 0)),
                   pl.BlockSpec((tb, n_actions), lambda i: (i, 0))),
        compiler_params=pltpu.CompilerParams(dimension_semantics=(sem,)),
    )(state, w1, w2, whead, bias_pack)
    return mu, sigma


def init_params(key, input_dim, fc1_dims, fc2_dims, n_actions):
    """nn.Linear-style U(-1/sqrt(fan_in), 1/sqrt(fan_in)); W stored (in, out)."""
    def linear(k, fan_in, fan_out):
        kw, kb = jax.random.split(k)
        bound = 1.0 / jnp.sqrt(jnp.float32(fan_in))
        w = jax.random.uniform(kw, (fan_in, fan_out), jnp.float32, -bound, bound)
        b = jax.random.uniform(kb, (1, fan_out), jnp.float32, -bound, bound)
        return w, b

    k1, k2, k3, k4 = jax.random.split(key, 4)
    w1, b1 = linear(k1, input_dim, fc1_dims)
    w2, b2 = linear(k2, fc1_dims, fc2_dims)
    wmu, bmu = linear(k3, fc2_dims, n_actions)
    wsig, bsig = linear(k4, fc2_dims, n_actions)
    return dict(w1=w1, b1=b1, w2=w2, b2=b2,
                wmu=wmu, bmu=bmu, wsig=wsig, bsig=bsig)


def pack_params(p, weight_dtype=jnp.float32):
    """Fuse mu|sigma heads into one (FC2, 2A) weight; pack biases into one block."""
    fc1 = p["w1"].shape[1]
    fc2 = p["w2"].shape[1]
    a = p["wmu"].shape[1]
    head_w = 2 * a

    whead = jnp.concatenate([p["wmu"], p["wsig"]], axis=1)          # (FC2, 2A)

    pack_w = max(fc1, fc2, head_w)
    bias_pack = jnp.zeros((3, pack_w), jnp.float32)
    bias_pack = (bias_pack
                 .at[0, :fc1].set(p["b1"][0])
                 .at[1, :fc2].set(p["b2"][0])
                 .at[2, :a].set(p["bmu"][0])
                 .at[2, a:head_w].set(p["bsig"][0]))

    return dict(w1=p["w1"].astype(weight_dtype),
                w2=p["w2"].astype(weight_dtype),
                whead=whead.astype(weight_dtype),
                bias_pack=bias_pack)        # biases stay f32 (added post-matmul)


def actor_forward_ref(state, p):
    """Pure-JAX reference (unfused) for correctness check."""
    x = jnp.maximum(state @ p["w1"] + p["b1"], 0.0)
    x = jnp.maximum(x @ p["w2"] + p["b2"], 0.0)
    mu = x @ p["wmu"] + p["bmu"]
    sigma = jnp.clip(x @ p["wsig"] + p["bsig"], REPARAM_NOISE, 1.0)
    return mu, sigma


if __name__ == "__main__":
    # Small shapes consistent with the module: input_dims=[8], fc1=32, fc2=32,
    # n_actions=2, batch=8.
    B, INPUT_DIM, FC1, FC2, N_ACTIONS = 8, 8, 32, 32, 2

    key = jax.random.PRNGKey(0)
    kp, ks, kb = jax.random.split(key, 3)
    params = init_params(kp, INPUT_DIM, FC1, FC2, N_ACTIONS)
    packed = pack_params(params)
    state = jax.random.normal(ks, (B, INPUT_DIM), jnp.float32)

    # Tolerance note: XLA's default f32 matmul on TPU and the in-kernel MXU
    # path may use different bf16-pass precision strategies; with O(1)
    # activations that is a ~1e-2 worst-case delta, so the checks below use a
    # tolerance that still catches structural errors (missing relu/bias,
    # swapped heads, wrong clamp) while tolerating precision-path differences.
    TOL_F32 = dict(atol=2e-2, rtol=2e-2)
    eps32 = jnp.float32(REPARAM_NOISE)

    # ---- small deployment shape (single grid step) -------------------------
    mu, sigma = actor_forward(state, packed, N_ACTIONS)
    jax.block_until_ready((mu, sigma))

    mu_ref, sigma_ref = actor_forward_ref(state, params)
    assert mu.shape == (B, N_ACTIONS) and sigma.shape == (B, N_ACTIONS)
    assert jnp.allclose(mu, mu_ref, **TOL_F32)
    assert jnp.allclose(sigma, sigma_ref, **TOL_F32)
    assert bool(jnp.all(sigma >= eps32)) and bool(jnp.all(sigma <= jnp.float32(1.0)))

    # ---- larger batch: exercises the 4096-row tiling + ragged edge tile ----
    BIG = 4100                                   # grid=(2,), 4-row edge tile
    state_big = jax.random.normal(kb, (BIG, INPUT_DIM), jnp.float32)
    mu_ref_b, sigma_ref_b = actor_forward_ref(state_big, params)

    def _close(a, b):
        return bool(jnp.allclose(a, b, **TOL_F32))

    try:   # prefer CORE_PARALLEL (v7x: both TensorCores split the batch axis)
        mu_b, sigma_b = actor_forward(state_big, packed, N_ACTIONS,
                                      core_parallel=True)
        jax.block_until_ready((mu_b, sigma_b))
        ok = _close(mu_b, mu_ref_b) and _close(sigma_b, sigma_ref_b)
    except Exception:
        ok = False
    if not ok:   # fall back if this chip/toolchain rejects CORE_PARALLEL
        mu_b, sigma_b = actor_forward(state_big, packed, N_ACTIONS,
                                      core_parallel=False)
        jax.block_until_ready((mu_b, sigma_b))
    assert _close(mu_b, mu_ref_b) and _close(sigma_b, sigma_ref_b)
    assert bool(jnp.all(sigma_b >= eps32))

    # ---- optional bf16 inputs (v5e HBM-bandwidth lever); f32 accumulation --
    packed_bf16 = pack_params(params, weight_dtype=jnp.bfloat16)
    mu_h, sigma_h = actor_forward(state.astype(jnp.bfloat16), packed_bf16,
                                  N_ACTIONS)
    jax.block_until_ready((mu_h, sigma_h))
    assert jnp.allclose(mu_h, mu_ref, atol=6e-2, rtol=6e-2)
    assert jnp.allclose(sigma_h, sigma_ref, atol=6e-2, rtol=6e-2)
    assert bool(jnp.all(sigma_h >= eps32)) and bool(jnp.all(sigma_h <= jnp.float32(1.0)))

    # TODO(synk): sample_normal (rsample + tanh squashing + log_prob) is a
    # separate stochastic method, not part of forward(); it can be fused into
    # this kernel later via pltpu.prng_seed / pltpu.prng_random_bits.
    print("KERNEL_OK")
</pallas_src>

<mosaic_0001>
module attributes {stable_mosaic.version = 11 : i64} {
  func.func @actor_kernel(%arg0: i32, %arg1: memref<8x8xf32, #tpu.memory_space<vmem>>, %arg2: memref<8x32xf32, #tpu.memory_space<vmem>>, %arg3: memref<32x32xf32, #tpu.memory_space<vmem>>, %arg4: memref<32x4xf32, #tpu.memory_space<vmem>>, %arg5: memref<3x32xf32, #tpu.memory_space<vmem>>, %arg6: memref<8x2xf32, #tpu.memory_space<vmem>>, %arg7: memref<8x2xf32, #tpu.memory_space<vmem>>) attributes {dimension_semantics = [#tpu.dimension_semantics<parallel>], iteration_bounds = array<i64: 1>, scalar_prefetch = 0 : i64, scratch_operands = 0 : i64, tpu.core_type = #tpu.core_type<tc>, window_params = [{transform_indices = @transform_0, window_bounds = array<i64: 8, 8>}, {pipeline_mode = #tpu.pipeline_mode<synchronous>, transform_indices = @transform_1, window_bounds = array<i64: 8, 32>}, {pipeline_mode = #tpu.pipeline_mode<synchronous>, transform_indices = @transform_2, window_bounds = array<i64: 32, 32>}, {pipeline_mode = #tpu.pipeline_mode<synchronous>, transform_indices = @transform_3, window_bounds = array<i64: 32, 4>}, {pipeline_mode = #tpu.pipeline_mode<synchronous>, transform_indices = @transform_4, window_bounds = array<i64: 3, 32>}, {transform_indices = @transform_5, window_bounds = array<i64: 8, 2>}, {transform_indices = @transform_6, window_bounds = array<i64: 8, 2>}]} {
    %c0 = arith.constant 0 : index
    %c0_0 = arith.constant 0 : index
    %0 = vector.load %arg5[%c0, %c0_0] : memref<3x32xf32, #tpu.memory_space<vmem>>, vector<1x32xf32>
    %c1 = arith.constant 1 : index
    %c0_1 = arith.constant 0 : index
    %1 = vector.load %arg5[%c1, %c0_1] : memref<3x32xf32, #tpu.memory_space<vmem>>, vector<1x32xf32>
    %c2 = arith.constant 2 : index
    %c0_2 = arith.constant 0 : index
    %2 = vector.load %arg5[%c2, %c0_2] : memref<3x32xf32, #tpu.memory_space<vmem>>, vector<1x4xf32>
    %c0_3 = arith.constant 0 : index
    %c0_4 = arith.constant 0 : index
    %3 = vector.load %arg1[%c0_3, %c0_4] : memref<8x8xf32, #tpu.memory_space<vmem>>, vector<8x8xf32>
    %c0_5 = arith.constant 0 : index
    %c0_6 = arith.constant 0 : index
    %4 = vector.load %arg2[%c0_5, %c0_6] : memref<8x32xf32, #tpu.memory_space<vmem>>, vector<8x32xf32>
    %cst = arith.constant dense<0.000000e+00> : vector<8x32xf32>
    %5 = tpu.matmul %3, %4, %cst {dimension_numbers = #tpu.dot_dimension_numbers<[1], [0], [0], [1], [0, 0, 1, 1], [], []>} : vector<8x8xf32>, vector<8x32xf32>, vector<8x32xf32> -> vector<8x32xf32>
    %6 = vector.broadcast %0 : vector<1x32xf32> to vector<8x32xf32>
    %7 = arith.addf %5, %6 : vector<8x32xf32>
    %cst_7 = arith.constant 0.000000e+00 : f32
    %8 = vector.broadcast %cst_7 : f32 to vector<8x32xf32>
    %9 = arith.maximumf %7, %8 : vector<8x32xf32>
    %c0_8 = arith.constant 0 : index
    %c0_9 = arith.constant 0 : index
    %10 = vector.load %arg3[%c0_8, %c0_9] : memref<32x32xf32, #tpu.memory_space<vmem>>, vector<32x32xf32>
    %cst_10 = arith.constant dense<0.000000e+00> : vector<8x32xf32>
    %11 = tpu.matmul %9, %10, %cst_10 {dimension_numbers = #tpu.dot_dimension_numbers<[1], [0], [0], [1], [0, 0, 1, 1], [], []>} : vector<8x32xf32>, vector<32x32xf32>, vector<8x32xf32> -> vector<8x32xf32>
    %12 = vector.broadcast %1 : vector<1x32xf32> to vector<8x32xf32>
    %13 = arith.addf %11, %12 : vector<8x32xf32>
    %cst_11 = arith.constant 0.000000e+00 : f32
    %14 = vector.broadcast %cst_11 : f32 to vector<8x32xf32>
    %15 = arith.maximumf %13, %14 : vector<8x32xf32>
    %c0_12 = arith.constant 0 : index
    %c0_13 = arith.constant 0 : index
    %16 = vector.load %arg4[%c0_12, %c0_13] : memref<32x4xf32, #tpu.memory_space<vmem>>, vector<32x4xf32>
    %cst_14 = arith.constant dense<0.000000e+00> : vector<8x4xf32>
    %17 = tpu.matmul %15, %16, %cst_14 {dimension_numbers = #tpu.dot_dimension_numbers<[1], [0], [0], [1], [0, 0, 1, 1], [], []>} : vector<8x32xf32>, vector<32x4xf32>, vector<8x4xf32> -> vector<8x4xf32>
    %18 = vector.broadcast %2 : vector<1x4xf32> to vector<8x4xf32>
    %19 = arith.addf %17, %18 : vector<8x4xf32>
    %20 = vector.extract_strided_slice %19 {offsets = [0, 0], sizes = [8, 2], strides = [1, 1]} : vector<8x4xf32> to vector<8x2xf32>
    %c0_15 = arith.constant 0 : index
    %c0_16 = arith.constant 0 : index
    %21 = vector.load %arg6[%c0_15, %c0_16] : memref<8x2xf32, #tpu.memory_space<vmem>>, vector<8x2xf32>
    tpu.vector_store %arg6[%c0_15, %c0_16], %20 {strides = array<i32>} : memref<8x2xf32, #tpu.memory_space<vmem>>, vector<8x2xf32>,
    %22 = vector.extract_strided_slice %19 {offsets = [0, 2], sizes = [8, 2], strides = [1, 1]} : vector<8x4xf32> to vector<8x2xf32>
    %cst_17 = arith.constant 9.99999997E-7 : f32
    %cst_18 = arith.constant 1.000000e+00 : f32
    %23 = vector.broadcast %cst_17 : f32 to vector<8x2xf32>
    %24 = arith.maximumf %23, %22 : vector<8x2xf32>
    %25 = vector.broadcast %cst_18 : f32 to vector<8x2xf32>
    %26 = arith.minimumf %25, %24 : vector<8x2xf32>
    %c0_19 = arith.constant 0 : index
    %c0_20 = arith.constant 0 : index
    %27 = vector.load %arg7[%c0_19, %c0_20] : memref<8x2xf32, #tpu.memory_space<vmem>>, vector<8x2xf32>
    tpu.vector_store %arg7[%c0_19, %c0_20], %26 {strides = array<i32>} : memref<8x2xf32, #tpu.memory_space<vmem>>, vector<8x2xf32>,
    return
  }
  func.func @transform_0(%arg0: i32) -> (i32, i32) {
    %c0_i32 = arith.constant 0 : i32
    %c0_i32_0 = arith.constant 0 : i32
    return %arg0, %c0_i32 : i32, i32
  }
  func.func @transform_1(%arg0: i32) -> (i32, i32) {
    %c0_i32 = arith.constant 0 : i32
    %c0_i32_0 = arith.constant 0 : i32
    %c0_i32_1 = arith.constant 0 : i32
    return %c0_i32, %c0_i32_0 : i32, i32
  }
  func.func @transform_2(%arg0: i32) -> (i32, i32) {
    %c0_i32 = arith.constant 0 : i32
    %c0_i32_0 = arith.constant 0 : i32
    %c0_i32_1 = arith.constant 0 : i32
    return %c0_i32, %c0_i32_0 : i32, i32
  }
  func.func @transform_3(%arg0: i32) -> (i32, i32) {
    %c0_i32 = arith.constant 0 : i32
    %c0_i32_0 = arith.constant 0 : i32
    %c0_i32_1 = arith.constant 0 : i32
    return %c0_i32, %c0_i32_0 : i32, i32
  }
  func.func @transform_4(%arg0: i32) -> (i32, i32) {
    %c0_i32 = arith.constant 0 : i32
    %c0_i32_0 = arith.constant 0 : i32
    %c0_i32_1 = arith.constant 0 : i32
    return %c0_i32, %c0_i32_0 : i32, i32
  }
  func.func @transform_5(%arg0: i32) -> (i32, i32) {
    %c0_i32 = arith.constant 0 : i32
    %c0_i32_0 = arith.constant 0 : i32
    return %arg0, %c0_i32 : i32, i32
  }
  func.func @transform_6(%arg0: i32) -> (i32, i32) {
    %c0_i32 = arith.constant 0 : i32
    %c0_i32_0 = arith.constant 0 : i32
    return %arg0, %c0_i32 : i32, i32
  }
}

</mosaic_0001>

<llo_original>
// kernel: tpu_custom_call.1
$region0: #{tpu_custom_call.1}
  #allocation0 [shape = 'u32[]', space=smem, size = 0x4, offset = 0x4, fixed_abs, tag = 'smem constant byte address 0x4 - core index']
  #allocation1 [shape = 'u32[144,128]{1,0:T(1,128)}', space=vmem, size = 0x12000, scoped, tag = 'internal scratch']
  %s0 = inlined_call_operand.vmem [shape: f32[8,8], index: 0, kind: input, shape index: {}]
  %s1 = inlined_call_operand.hbm [shape: f32[8,32], index: 1, kind: input, shape index: {}]
  %s2 = inlined_call_operand.vmem [shape: f32[32,32], index: 2, kind: input, shape index: {}]
  %s3 = inlined_call_operand.vmem [shape: f32[32,4], index: 3, kind: input, shape index: {}]
  %s4 = inlined_call_operand.vmem [shape: f32[3,32], index: 4, kind: input, shape index: {}]
  %s5 = inlined_call_operand.vmem [shape: f32[8,2], index: 5, kind: output, shape index: {0}]
  %s6 = inlined_call_operand.vmem [shape: f32[8,2], index: 6, kind: output, shape index: {1}]
  %7 = xla_tuple %s5, %s6
  %s8 = sld [smem:[#allocation0]]
  $region42: #{tpu_custom_call.1} parent=0
    _
  %s10 = ssub.s32 1, %s8
  %s11 = scalar_select 0, %s10, %s8
  $region1: #{tpu_custom_call.1} parent=0
    #allocation2 [shape = 'u8[4096]{0}', space=vmem, size = 0x1000, scoped, tag = 'input window, operand 1, single buffered']
    #allocation3 [shape = 's32[1]{0}', space=sflag, size = 0x4, scoped, tag = 'scoped memory for tpu_custom_call.1']
    %12 = vsyncpa [#allocation3], 0
    // Predicated region
    $region2: #{tpu_custom_call.1} parent=1 // pred_check
      _
    $region3: #{tpu_custom_call.1} parent=1 // pred_check_branch
      %14 = sbr.rel (0) target = $region5
    $region4: #{tpu_custom_call.1} parent=1 // pred_region
      _
    $region5: #{tpu_custom_call.1} parent=1 // pred_fallthru
      _
    // Predicated region
    $region6: #{tpu_custom_call.1} parent=1 // pred_check
      _
    $region7: #{tpu_custom_call.1} parent=1 // pred_check_branch
      %16 = sbr.rel (0) target = $region9
    $region8: #{tpu_custom_call.1} parent=1 // pred_region
      %s18 = ssub.s32 128, 128
      %19 = vsyncadd [#allocation3], %s18
      %s21 = sshll.u32 [#allocation2], 4
      %s22 = int_to_ptr.vmem [resolvable:$true] %s21
      %24 = dma.hbm_to_vmem [thread:$0]  %s1, 128, %s22, [#allocation3]
    $region9: #{tpu_custom_call.1} parent=1 // pred_fallthru
      _
    // Predicated region
    $region10: #{tpu_custom_call.1} parent=1 // pred_check
      _
    $region11: #{tpu_custom_call.1} parent=1 // pred_check_branch
      %26 = sbr.rel (0) target = $region13
    $region12: #{tpu_custom_call.1} parent=1 // pred_region
      _
    $region13: #{tpu_custom_call.1} parent=1 // pred_fallthru
      _
    // Predicated region
    $region14: #{tpu_custom_call.1} parent=1 // pred_check
      _
    $region15: #{tpu_custom_call.1} parent=1 // pred_check_branch
      %28 = sbr.rel (0) target = $region17
    $region16: #{tpu_custom_call.1} parent=1 // pred_region
      _
    $region17: #{tpu_custom_call.1} parent=1 // pred_fallthru
      _
    // Predicated region
    $region18: #{tpu_custom_call.1} parent=1 // pred_check
      _
    $region19: #{tpu_custom_call.1} parent=1 // pred_check_branch
      %30 = sbr.rel (0) target = $region21
    $region20: #{tpu_custom_call.1} parent=1 // pred_region
      _
    $region21: #{tpu_custom_call.1} parent=1 // pred_fallthru
      _
    // Predicated region
    $region22: #{tpu_custom_call.1} parent=1 // pred_check
      _
    $region23: #{tpu_custom_call.1} parent=1 // pred_check_branch
      %32 = sbr.rel (0) target = $region25
    $region24: #{tpu_custom_call.1} parent=1 // pred_region
      %33 = dma.done [#allocation3], 128
    $region25: #{tpu_custom_call.1} parent=1 // pred_fallthru
      _
    %v34 = vld [vmem:[%s4] sm:$0x1]
    %v35 = vld [vmem:[%s4 + $0x1] sm:$0x1]
    %v36 = vld [vmem:[%s4 + $0x2] sm:$0x1]
    %v37 = vld [vmem:[%s0] sm:$0xff]
    %v38 = vld [vmem:[#allocation2] sm:$0xff]
    %v39 = vlaneseq
    %v40 = vshrl.u32 %v39, 7
    %v41 = vsub.s32 0, %v40
    %v42 = vrot.slane %v34, %v41
    %vm43 = vcmask 64512
    %v45 = vsel %vm43, %v37, 0
    %47 = vmatprep.subr.mxu0 0.0
    %48 = vmatpush1.msra.mxu0 %v38
    %49 = vmatprep.subr.mxu0 0.0
    %50 = vmatpush1.msra.mxu0 0.0
    %51 = vmatprep.subr.mxu0 0.0
    %52 = vmatpush1.msra.mxu0 0.0
    %53 = vmatprep.subr.mxu0 0.0
    %54 = vmatpush1.msra.mxu0 0.0
    %55 = vmatprep.subr.mxu0 0.0
    %56 = vmatpush1.msra.mxu0 0.0
    %57 = vmatprep.subr.mxu0 0.0
    %58 = vmatpush1.msra.mxu0 0.0
    %59 = vmatprep.subr.mxu0 0.0
    %60 = vmatpush1.msra.mxu0 0.0
    %61 = vmatprep.subr.mxu0 0.0
    %62 = vmatpush1.msra.mxu0 0.0
    %63 = vmatprep.subr.mxu0 0.0
    %64 = vmatpush1.msra.mxu0 0.0
    %65 = vmatprep.subr.mxu0 0.0
    %66 = vmatpush1.msra.mxu0 0.0
    %67 = vmatprep.subr.mxu0 0.0
    %68 = vmatpush1.msra.mxu0 0.0
    %69 = vmatprep.subr.mxu0 0.0
    %70 = vmatpush1.msra.mxu0 0.0
    %71 = vmatprep.subr.mxu0 0.0
    %72 = vmatpush1.msra.mxu0 0.0
    %73 = vmatprep.subr.mxu0 0.0
    %74 = vmatpush1.msra.mxu0 0.0
    %75 = vmatprep.subr.mxu0 0.0
    %76 = vmatpush1.msra.mxu0 0.0
    %77 = vmatprep.subr.mxu0 0.0
    %78 = vmatpush1.msra.mxu0 0.0
    %79 = vmatprep.subr.mxu0 0.0
    %80 = vmatpush1.msra.mxu0 0.0
    %81 = vmatprep.subr.mxu0 0.0
    %82 = vmatpush1.msra.mxu0 0.0
    %83 = vmatprep.subr.mxu0 0.0
    %84 = vmatpush1.msra.mxu0 0.0
    %85 = vmatprep.subr.mxu0 0.0
    %86 = vmatpush1.msra.mxu0 0.0
    %87 = vmatprep.subr.mxu0 0.0
    %88 = vmatpush1.msra.mxu0 0.0
    %89 = vmatprep.subr.mxu0 0.0
    %90 = vmatpush1.msra.mxu0 0.0
    %91 = vmatprep.subr.mxu0 0.0
    %92 = vmatpush1.msra.mxu0 0.0
    %93 = vmatprep.subr.mxu0 0.0
    %94 = vmatpush1.msra.mxu0 0.0
    %95 = vmatprep.subr.mxu0 0.0
    %96 = vmatpush1.msra.mxu0 0.0
    %97 = vmatprep.subr.mxu0 0.0
    %98 = vmatpush1.msra.mxu0 0.0
    %99 = vmatprep.subr.mxu0 0.0
    %100 = vmatpush1.msra.mxu0 0.0
    %101 = vmatprep.subr.mxu0 0.0
    %102 = vmatpush1.msra.mxu0 0.0
    %103 = vmatprep.subr.mxu0 0.0
    %104 = vmatpush1.msra.mxu0 0.0
    %105 = vmatprep.subr.mxu0 0.0
    %106 = vmatpush1.msra.mxu0 0.0
    %107 = vmatprep.subr.mxu0 0.0
    %108 = vmatpush1.msra.mxu0 0.0
    %109 = vmatprep.subr.mxu0 0.0
    %110 = vmatpush1.msra.mxu0 0.0
    %111 = vmatprep.mubr.f32.mxu0 0.0
    %112 = vmatmul.mubr.f32.gmra.mrb[0].mxu0 %v45
    %v113 = vpop.f32.mrb[0].mxu0
    %v114 = vadd.f32 %v42, %v113
    %v115 = vpop.f32.mrb[0].mxu0
    %116 = vdwg.mxu0
    %v117 = vmax.f32 %v114, 0.0
    %v118 = vld [vmem:[%s2] sm:$0xff]
    %v119 = vld [vmem:[%s2 + $0x8] sm:$0xff]
    %v120 = vld [vmem:[%s2 + $0x10] sm:$0xff]
    %v121 = vld [vmem:[%s2 + $0x18] sm:$0xff]
    %v122 = vlaneseq
    %v123 = vshrl.u32 %v122, 7
    %v124 = vsub.s32 0, %v123
    %v125 = vrot.slane %v35, %v124
    %vm126 = vcmask 261120
    %v128 = vsel %vm126, %v117, 0
    %130 = vmatprep.subr.mxu0 0.0
    %131 = vmatpush1.msra.mxu0 %v118
    %132 = vmatprep.subr.mxu0 0.0
    %133 = vmatpush1.msra.mxu0 %v119
    %134 = vmatprep.subr.mxu0 0.0
    %135 = vmatpush1.msra.mxu0 %v120
    %136 = vmatprep.subr.mxu0 0.0
    %137 = vmatpush1.msra.mxu0 %v121
    %138 = vmatprep.subr.mxu0 0.0
    %139 = vmatpush1.msra.mxu0 0.0
    %140 = vmatprep.subr.mxu0 0.0
    %141 = vmatpush1.msra.mxu0 0.0
    %142 = vmatprep.subr.mxu0 0.0
    %143 = vmatpush1.msra.mxu0 0.0
    %144 = vmatprep.subr.mxu0 0.0
    %145 = vmatpush1.msra.mxu0 0.0
    %146 = vmatprep.subr.mxu0 0.0
    %147 = vmatpush1.msra.mxu0 0.0
    %148 = vmatprep.subr.mxu0 0.0
    %149 = vmatpush1.msra.mxu0 0.0
    %150 = vmatprep.subr.mxu0 0.0
    %151 = vmatpush1.msra.mxu0 0.0
    %152 = vmatprep.subr.mxu0 0.0
    %153 = vmatpush1.msra.mxu0 0.0
    %154 = vmatprep.subr.mxu0 0.0
    %155 = vmatpush1.msra.mxu0 0.0
    %156 = vmatprep.subr.mxu0 0.0
    %157 = vmatpush1.msra.mxu0 0.0
    %158 = vmatprep.subr.mxu0 0.0
    %159 = vmatpush1.msra.mxu0 0.0
    %160 = vmatprep.subr.mxu0 0.0
    %161 = vmatpush1.msra.mxu0 0.0
    %162 = vmatprep.subr.mxu0 0.0
    %163 = vmatpush1.msra.mxu0 0.0
    %164 = vmatprep.subr.mxu0 0.0
    %165 = vmatpush1.msra.mxu0 0.0
    %166 = vmatprep.subr.mxu0 0.0
    %167 = vmatpush1.msra.mxu0 0.0
    %168 = vmatprep.subr.mxu0 0.0
    %169 = vmatpush1.msra.mxu0 0.0
    %170 = vmatprep.subr.mxu0 0.0
    %171 = vmatpush1.msra.mxu0 0.0
    %172 = vmatprep.subr.mxu0 0.0
    %173 = vmatpush1.msra.mxu0 0.0
    %174 = vmatprep.subr.mxu0 0.0
    %175 = vmatpush1.msra.mxu0 0.0
    %176 = vmatprep.subr.mxu0 0.0
    %177 = vmatpush1.msra.mxu0 0.0
    %178 = vmatprep.subr.mxu0 0.0
    %179 = vmatpush1.msra.mxu0 0.0
    %180 = vmatprep.subr.mxu0 0.0
    %181 = vmatpush1.msra.mxu0 0.0
    %182 = vmatprep.subr.mxu0 0.0
    %183 = vmatpush1.msra.mxu0 0.0
    %184 = vmatprep.subr.mxu0 0.0
    %185 = vmatpush1.msra.mxu0 0.0
    %186 = vmatprep.subr.mxu0 0.0
    %187 = vmatpush1.msra.mxu0 0.0
    %188 = vmatprep.subr.mxu0 0.0
    %189 = vmatpush1.msra.mxu0 0.0
    %190 = vmatprep.subr.mxu0 0.0
    %191 = vmatpush1.msra.mxu0 0.0
    %192 = vmatprep.subr.mxu0 0.0
    %193 = vmatpush1.msra.mxu0 0.0
    %194 = vmatprep.mubr.f32.mxu0 0.0
    %195 = vmatmul.mubr.f32.gmra.mrb[0].mxu0 %v128
    %v196 = vpop.f32.mrb[0].mxu0
    %v197 = vadd.f32 %v125, %v196
    %v198 = vpop.f32.mrb[0].mxu0
    %199 = vdwg.mxu0
    %v200 = vmax.f32 %v197, 0.0
    %v201 = vld [vmem:[%s3] sm:$0xff]
    %v202 = vld [vmem:[%s3 + $0x8] sm:$0xff]
    %v203 = vld [vmem:[%s3 + $0x10] sm:$0xff]
    %v204 = vld [vmem:[%s3 + $0x18] sm:$0xff]
    %v205 = vlaneseq
    %v206 = vshrl.u32 %v205, 7
    %v207 = vsub.s32 0, %v206
    %v208 = vrot.slane %v36, %v207
    %v210 = vsel %vm126, %v200, 0
    %212 = vmatprep.subr.mxu0 0.0
    %213 = vmatpush1.msra.mxu0 %v201
    %214 = vmatprep.subr.mxu0 0.0
    %215 = vmatpush1.msra.mxu0 %v202
    %216 = vmatprep.subr.mxu0 0.0
    %217 = vmatpush1.msra.mxu0 %v203
    %218 = vmatprep.subr.mxu0 0.0
    %219 = vmatpush1.msra.mxu0 %v204
    %220 = vmatprep.subr.mxu0 0.0
    %221 = vmatpush1.msra.mxu0 0.0
    %222 = vmatprep.subr.mxu0 0.0
    %223 = vmatpush1.msra.mxu0 0.0
    %224 = vmatprep.subr.mxu0 0.0
    %225 = vmatpush1.msra.mxu0 0.0
    %226 = vmatprep.subr.mxu0 0.0
    %227 = vmatpush1.msra.mxu0 0.0
    %228 = vmatprep.subr.mxu0 0.0
    %229 = vmatpush1.msra.mxu0 0.0
    %230 = vmatprep.subr.mxu0 0.0
    %231 = vmatpush1.msra.mxu0 0.0
    %232 = vmatprep.subr.mxu0 0.0
    %233 = vmatpush1.msra.mxu0 0.0
    %234 = vmatprep.subr.mxu0 0.0
    %235 = vmatpush1.msra.mxu0 0.0
    %236 = vmatprep.subr.mxu0 0.0
    %237 = vmatpush1.msra.mxu0 0.0
    %238 = vmatprep.subr.mxu0 0.0
    %239 = vmatpush1.msra.mxu0 0.0
    %240 = vmatprep.subr.mxu0 0.0
    %241 = vmatpush1.msra.mxu0 0.0
    %242 = vmatprep.subr.mxu0 0.0
    %243 = vmatpush1.msra.mxu0 0.0
    %244 = vmatprep.subr.mxu0 0.0
    %245 = vmatpush1.msra.mxu0 0.0
    %246 = vmatprep.subr.mxu0 0.0
    %247 = vmatpush1.msra.mxu0 0.0
    %248 = vmatprep.subr.mxu0 0.0
    %249 = vmatpush1.msra.mxu0 0.0
    %250 = vmatprep.subr.mxu0 0.0
    %251 = vmatpush1.msra.mxu0 0.0
    %252 = vmatprep.subr.mxu0 0.0
    %253 = vmatpush1.msra.mxu0 0.0
    %254 = vmatprep.subr.mxu0 0.0
    %255 = vmatpush1.msra.mxu0 0.0
    %256 = vmatprep.subr.mxu0 0.0
    %257 = vmatpush1.msra.mxu0 0.0
    %258 = vmatprep.subr.mxu0 0.0
    %259 = vmatpush1.msra.mxu0 0.0
    %260 = vmatprep.subr.mxu0 0.0
    %261 = vmatpush1.msra.mxu0 0.0
    %262 = vmatprep.subr.mxu0 0.0
    %263 = vmatpush1.msra.mxu0 0.0
    %264 = vmatprep.subr.mxu0 0.0
    %265 = vmatpush1.msra.mxu0 0.0
    %266 = vmatprep.subr.mxu0 0.0
    %267 = vmatpush1.msra.mxu0 0.0
    %268 = vmatprep.subr.mxu0 0.0
    %269 = vmatpush1.msra.mxu0 0.0
    %270 = vmatprep.subr.mxu0 0.0
    %271 = vmatpush1.msra.mxu0 0.0
    %272 = vmatprep.subr.mxu0 0.0
    %273 = vmatpush1.msra.mxu0 0.0
    %274 = vmatprep.subr.mxu0 0.0
    %275 = vmatpush1.msra.mxu0 0.0
    %276 = vmatprep.mubr.f32.mxu0 0.0
    %277 = vmatmul.mubr.f32.gmra.mrb[0].mxu0 %v210
    %v278 = vpop.f32.mrb[0].mxu0
    %v279 = vadd.f32 %v208, %v278
    %v280 = vpop.f32.mrb[0].mxu0
    %281 = vdwg.mxu0
    %vm282 = vcmask 15360
    %283 = vst.msk [vmem:[%s5] sm:$0xff] %vm282, %v279
    %v284 = vmax.f32 %v279, 1e-06
    %v285 = vmin.f32 %v284, 1.0
    %287 = vrot.lane.b32.xlu0 %v285, 126
    %v288 = vpop.permute.xlu0 %287
    %290 = vst.msk [vmem:[%s6] sm:$0xff] %vm282, %v288
    // Predicated region
    $region26: #{tpu_custom_call.1} parent=1 // pred_check
      _
    $region27: #{tpu_custom_call.1} parent=1 // pred_check_branch
      %292 = sbr.rel (0) target = $region29
    $region28: #{tpu_custom_call.1} parent=1 // pred_region
      _
    $region29: #{tpu_custom_call.1} parent=1 // pred_fallthru
      _
    // Predicated region
    $region30: #{tpu_custom_call.1} parent=1 // pred_check
      _
    $region31: #{tpu_custom_call.1} parent=1 // pred_check_branch
      %294 = sbr.rel (0) target = $region33
    $region32: #{tpu_custom_call.1} parent=1 // pred_region
      _
    $region33: #{tpu_custom_call.1} parent=1 // pred_fallthru
      _
    // Predicated region
    $region34: #{tpu_custom_call.1} parent=1 // pred_check
      _
    $region35: #{tpu_custom_call.1} parent=1 // pred_check_branch
      %296 = sbr.rel (0) target = $region37
    $region36: #{tpu_custom_call.1} parent=1 // pred_region
      _
    $region37: #{tpu_custom_call.1} parent=1 // pred_fallthru
      _
    // Predicated region
    $region38: #{tpu_custom_call.1} parent=1 // pred_check
      _
    $region39: #{tpu_custom_call.1} parent=1 // pred_check_branch
      %298 = sbr.rel (0) target = $region41
    $region40: #{tpu_custom_call.1} parent=1 // pred_region
      _
    $region41: #{tpu_custom_call.1} parent=1 // pred_fallthru
      _
    %299 = vsyncpa [#allocation3], 1

</llo_original>
